<compile_context>
chip_gen: v5e
topology: v5e:2x2
jax: 0.10.0
libtpu: 0.0.40
codegen_flags: <defaults>
</compile_context>

<pallas_src>
import functools

import numpy as np
import jax
import jax.numpy as jnp
from jax import lax
from jax.experimental import pallas as pl
from jax.experimental.pallas import tpu as pltpu


def _random_shift_kernel(shift_ref, xp_ref, o_ref, *, h, w, pad, bt):
    # shift_ref : SMEM (n, 2) int32  -- per-image (shift_x, shift_y) in [0, 2*pad]
    # xp_ref    : VMEM (bt, c, Hp+1, Wp+1) -- replicate-padded images + zero row/col
    # o_ref     : VMEM (bt, c, h, w)
    Hp = h + 2 * pad                       # padded height == padded width (h == w)

    # ---- shift-invariant grid math, hoisted out of the per-image loop ----------
    eps = 1.0 / Hp
    step = (2.0 - 2.0 * eps) / (Hp - 1)    # == 2/Hp up to fp rounding (as in torch)
    colf = lax.broadcasted_iota(jnp.int32, (1, w), 1).astype(jnp.float32)  # x index
    rowf = lax.broadcasted_iota(jnp.int32, (h, 1), 0).astype(jnp.float32)  # y index
    base_x = (-1.0 + eps) + colf * step                                    # (1, w)
    base_y = (-1.0 + eps) + rowf * step                                    # (h, 1)

    img0 = pl.program_id(0) * bt
    for j in range(bt):                    # static unrolled loop over the batch tile
        kx = shift_ref[img0 + j, 0]
        ky = shift_ref[img0 + j, 1]
        kxf = kx.astype(jnp.float32)
        kyf = ky.astype(jnp.float32)

        # normalized grid = base + shift*2/Hp ; unnormalize (align_corners=False):
        #   ix = ((gx + 1) * Hp - 1) / 2   -> lands on pixel centers up to fp noise.
        gx = base_x + 2.0 * kxf / Hp
        gy = base_y + 2.0 * kyf / Hp
        ixf = ((gx + 1.0) * Hp - 1.0) * 0.5
        iyf = ((gy + 1.0) * Hp - 1.0) * 0.5
        wx = (ixf - (colf + kxf))[None]    # (1, 1, w)  residual bilinear weight in x
        wy = (iyf - (rowf + kyf))[None]    # (1, h, 1)  residual bilinear weight in y

        # y shift: two dynamic sublane-axis slices (rows ky and ky+1), full lane width
        top = xp_ref[j, :, pl.ds(ky, h), :]        # (c, h, Wp+1)
        bot = xp_ref[j, :, pl.ds(ky + 1, h), :]    # (c, h, Wp+1)
        ry = top * (1.0 - wy) + bot * wy           # (c, h, Wp+1)

        # x shift: pick columns [kx, kx+w] via a static select chain over 2*pad+1
        # candidates (exact 0/1 blend factors -> exact selection, pure VPU).
        acc = ry[:, :, 0:w + 1]
        for k in range(1, 2 * pad + 1):
            sel = (kx == k).astype(jnp.float32)
            acc = acc * (1.0 - sel) + ry[:, :, k:k + w + 1] * sel

        left = acc[:, :, :w]
        right = acc[:, :, 1:w + 1]
        o_ref[j] = (left * (1.0 - wx) + right * wx).astype(o_ref.dtype)


def random_shifts_aug(x, shift, pad):
    """x: (n, c, h, w) float32 (NCHW, as PyTorch); shift: (n, 2) int32 in [0, 2*pad]."""
    n, c, h, w = x.shape
    assert h == w
    Hp = h + 2 * pad

    # glue: F.pad(x, (pad,)*4, 'replicate'), plus one zero row/col so the +1 bilinear
    # taps see zeros (grid_sample padding_mode='zeros').
    xp = jnp.pad(x, ((0, 0), (0, 0), (pad, pad), (pad, pad)), mode="edge")
    xp = jnp.pad(xp, ((0, 0), (0, 0), (0, 1), (0, 1)))

    # batch tile: largest divisor of n that is <= 16 (keeps blocks exact, VMEM small)
    bt = 1
    for cand in range(min(n, 16), 0, -1):
        if n % cand == 0:
            bt = cand
            break

    kernel = functools.partial(_random_shift_kernel, h=h, w=w, pad=pad, bt=bt)
    out = pl.pallas_call(
        kernel,
        out_shape=jax.ShapeDtypeStruct((n, c, h, w), x.dtype),
        grid_spec=pltpu.PrefetchScalarGridSpec(
            num_scalar_prefetch=1,                 # shift table lives in SMEM
            grid=(n // bt,),                       # bt images per program
            in_specs=[pl.BlockSpec((bt, c, Hp + 1, Hp + 1),
                                   lambda i, s: (i, 0, 0, 0))],
            out_specs=pl.BlockSpec((bt, c, h, w),
                                   lambda i, s: (i, 0, 0, 0)),
        ),
        compiler_params=pltpu.CompilerParams(
            dimension_semantics=("parallel",),
            vmem_limit_bytes=32 * 1024 * 1024,
        ),
    )(shift, xp)
    return out


if __name__ == "__main__":
    key = jax.random.PRNGKey(0)
    k_x, k_s = jax.random.split(key)

    n, c, h, w = 2, 4, 16, 16
    pad = 4

    x = jax.random.normal(k_x, (n, c, h, w), dtype=jnp.float32)
    # torch.randint(0, 2*pad+1, size=(n,1,1,2)) -> per-image integer pixel shifts
    # (torch RNG stream itself is not reproducible in JAX; distribution/semantics match)
    shift = jax.random.randint(k_s, (n, 2), 0, 2 * pad + 1, dtype=jnp.int32)

    out = jax.block_until_ready(random_shifts_aug(x, shift, pad))

    # reference: the bilinear samples land exactly on pixel centers, i.e. an integer
    # crop of the replicate-padded image (up to fp rounding noise in the grid)
    xp_np = np.pad(np.asarray(x), ((0, 0), (0, 0), (pad, pad), (pad, pad)), mode="edge")
    s_np = np.asarray(shift)
    ref = np.stack([xp_np[b, :, s_np[b, 1]:s_np[b, 1] + h, s_np[b, 0]:s_np[b, 0] + w]
                    for b in range(n)])

    assert out.shape == (n, c, h, w)
    assert np.allclose(np.asarray(out), ref, atol=1e-4), float(np.abs(np.asarray(out) - ref).max())
    print("KERNEL_OK")
</pallas_src>

<mosaic_0001>
module attributes {stable_mosaic.version = 11 : i64} {
  func.func @_random_shift_kernel(%arg0: i32, %arg1: memref<2x2xi32, #tpu.memory_space<smem>>, %arg2: memref<2x4x25x25xf32, #tpu.memory_space<vmem>>, %arg3: memref<2x4x16x16xf32, #tpu.memory_space<vmem>>) attributes {dimension_semantics = [#tpu.dimension_semantics<parallel>], iteration_bounds = array<i64: 1>, scalar_prefetch = 1 : i64, scratch_operands = 0 : i64, tpu.core_type = #tpu.core_type<tc>, window_params = [{transform_indices = @transform_0, window_bounds = array<i64: 2, 4, 25, 25>}, {transform_indices = @transform_1, window_bounds = array<i64: 2, 4, 16, 16>}]} {
    %0 = tpu.iota {dimensions = array<i32: 1>} : vector<1x16xi32>
    %1 = arith.sitofp %0 : vector<1x16xi32> to vector<1x16xf32>
    %2 = tpu.iota {dimensions = array<i32: 0>} : vector<16x1xi32>
    %3 = arith.sitofp %2 : vector<16x1xi32> to vector<16x1xf32>
    %cst = arith.constant 0.0833333358 : f32
    %4 = vector.broadcast %cst : f32 to vector<1x16xf32>
    %5 = arith.mulf %1, %4 : vector<1x16xf32>
    %cst_0 = arith.constant -0.958333313 : f32
    %6 = vector.broadcast %cst_0 : f32 to vector<1x16xf32>
    %7 = arith.addf %6, %5 : vector<1x16xf32>
    %cst_1 = arith.constant 0.0833333358 : f32
    %8 = vector.broadcast %cst_1 : f32 to vector<16x1xf32>
    %9 = arith.mulf %3, %8 : vector<16x1xf32>
    %cst_2 = arith.constant -0.958333313 : f32
    %10 = vector.broadcast %cst_2 : f32 to vector<16x1xf32>
    %11 = arith.addf %10, %9 : vector<16x1xf32>
    %c2_i32 = arith.constant 2 : i32
    %12 = arith.muli %arg0, %c2_i32 : i32
    %c0_i32 = arith.constant 0 : i32
    %13 = arith.addi %12, %c0_i32 : i32
    %14 = arith.index_cast %13 : i32 to index
    %c0 = arith.constant 0 : index
    %15 = memref.load %arg1[%14, %c0] : memref<2x2xi32, #tpu.memory_space<smem>>
    %c0_i32_3 = arith.constant 0 : i32
    %16 = arith.addi %12, %c0_i32_3 : i32
    %17 = arith.index_cast %16 : i32 to index
    %c1 = arith.constant 1 : index
    %18 = memref.load %arg1[%17, %c1] : memref<2x2xi32, #tpu.memory_space<smem>>
    %19 = arith.sitofp %15 : i32 to f32
    %20 = arith.sitofp %18 : i32 to f32
    %cst_4 = arith.constant 2.000000e+00 : f32
    %21 = arith.mulf %cst_4, %19 : f32
    %cst_5 = arith.constant 2.400000e+01 : f32
    %22 = arith.divf %21, %cst_5 : f32
    %23 = vector.broadcast %22 : f32 to vector<1x16xf32>
    %24 = arith.addf %7, %23 : vector<1x16xf32>
    %cst_6 = arith.constant 2.000000e+00 : f32
    %25 = arith.mulf %cst_6, %20 : f32
    %cst_7 = arith.constant 2.400000e+01 : f32
    %26 = arith.divf %25, %cst_7 : f32
    %27 = vector.broadcast %26 : f32 to vector<16x1xf32>
    %28 = arith.addf %11, %27 : vector<16x1xf32>
    %cst_8 = arith.constant 1.000000e+00 : f32
    %29 = vector.broadcast %cst_8 : f32 to vector<1x16xf32>
    %30 = arith.addf %24, %29 : vector<1x16xf32>
    %cst_9 = arith.constant 2.400000e+01 : f32
    %31 = vector.broadcast %cst_9 : f32 to vector<1x16xf32>
    %32 = arith.mulf %30, %31 : vector<1x16xf32>
    %cst_10 = arith.constant 1.000000e+00 : f32
    %33 = vector.broadcast %cst_10 : f32 to vector<1x16xf32>
    %34 = arith.subf %32, %33 : vector<1x16xf32>
    %cst_11 = arith.constant 5.000000e-01 : f32
    %35 = vector.broadcast %cst_11 : f32 to vector<1x16xf32>
    %36 = arith.mulf %34, %35 : vector<1x16xf32>
    %cst_12 = arith.constant 1.000000e+00 : f32
    %37 = vector.broadcast %cst_12 : f32 to vector<16x1xf32>
    %38 = arith.addf %28, %37 : vector<16x1xf32>
    %cst_13 = arith.constant 2.400000e+01 : f32
    %39 = vector.broadcast %cst_13 : f32 to vector<16x1xf32>
    %40 = arith.mulf %38, %39 : vector<16x1xf32>
    %cst_14 = arith.constant 1.000000e+00 : f32
    %41 = vector.broadcast %cst_14 : f32 to vector<16x1xf32>
    %42 = arith.subf %40, %41 : vector<16x1xf32>
    %cst_15 = arith.constant 5.000000e-01 : f32
    %43 = vector.broadcast %cst_15 : f32 to vector<16x1xf32>
    %44 = arith.mulf %42, %43 : vector<16x1xf32>
    %45 = vector.broadcast %19 : f32 to vector<1x16xf32>
    %46 = arith.addf %1, %45 : vector<1x16xf32>
    %47 = arith.subf %36, %46 : vector<1x16xf32>
    %48 = vector.shape_cast %47 : vector<1x16xf32> to vector<1x1x16xf32>
    %49 = vector.broadcast %20 : f32 to vector<16x1xf32>
    %50 = arith.addf %3, %49 : vector<16x1xf32>
    %51 = arith.subf %44, %50 : vector<16x1xf32>
    %52 = vector.shape_cast %51 : vector<16x1xf32> to vector<1x16x1xf32>
    %c0_16 = arith.constant 0 : index
    %c0_17 = arith.constant 0 : index
    %53 = arith.index_cast %18 : i32 to index
    %c0_18 = arith.constant 0 : index
    %54 = vector.load %arg2[%c0_16, %c0_17, %53, %c0_18] : memref<2x4x25x25xf32, #tpu.memory_space<vmem>>, vector<1x4x16x25xf32>
    %55 = vector.shape_cast %54 : vector<1x4x16x25xf32> to vector<4x16x25xf32>
    %c1_i32 = arith.constant 1 : i32
    %56 = arith.addi %18, %c1_i32 : i32
    %c0_19 = arith.constant 0 : index
    %c0_20 = arith.constant 0 : index
    %57 = arith.index_cast %56 : i32 to index
    %c0_21 = arith.constant 0 : index
    %58 = vector.load %arg2[%c0_19, %c0_20, %57, %c0_21] : memref<2x4x25x25xf32, #tpu.memory_space<vmem>>, vector<1x4x16x25xf32>
    %59 = vector.shape_cast %58 : vector<1x4x16x25xf32> to vector<4x16x25xf32>
    %cst_22 = arith.constant 1.000000e+00 : f32
    %60 = vector.broadcast %cst_22 : f32 to vector<1x16x1xf32>
    %61 = arith.subf %60, %52 : vector<1x16x1xf32>
    %62 = vector.broadcast %61 : vector<1x16x1xf32> to vector<4x16x25xf32>
    %63 = arith.mulf %55, %62 : vector<4x16x25xf32>
    %64 = vector.broadcast %52 : vector<1x16x1xf32> to vector<4x16x25xf32>
    %65 = arith.mulf %59, %64 : vector<4x16x25xf32>
    %66 = arith.addf %63, %65 : vector<4x16x25xf32>
    %67 = vector.extract_strided_slice %66 {offsets = [0, 0, 0], sizes = [4, 16, 17], strides = [1, 1, 1]} : vector<4x16x25xf32> to vector<4x16x17xf32>
    %c1_i32_23 = arith.constant 1 : i32
    %68 = arith.cmpi eq, %15, %c1_i32_23 : i32
    %69 = arith.extui %68 : i1 to i32
    %70 = arith.sitofp %69 : i32 to f32
    %cst_24 = arith.constant 1.000000e+00 : f32
    %71 = arith.subf %cst_24, %70 : f32
    %72 = vector.broadcast %71 : f32 to vector<4x16x17xf32>
    %73 = arith.mulf %67, %72 : vector<4x16x17xf32>
    %74 = vector.extract_strided_slice %66 {offsets = [0, 0, 1], sizes = [4, 16, 17], strides = [1, 1, 1]} : vector<4x16x25xf32> to vector<4x16x17xf32>
    %75 = vector.broadcast %70 : f32 to vector<4x16x17xf32>
    %76 = arith.mulf %74, %75 : vector<4x16x17xf32>
    %77 = arith.addf %73, %76 : vector<4x16x17xf32>
    %c2_i32_25 = arith.constant 2 : i32
    %78 = arith.cmpi eq, %15, %c2_i32_25 : i32
    %79 = arith.extui %78 : i1 to i32
    %80 = arith.sitofp %79 : i32 to f32
    %cst_26 = arith.constant 1.000000e+00 : f32
    %81 = arith.subf %cst_26, %80 : f32
    %82 = vector.broadcast %81 : f32 to vector<4x16x17xf32>
    %83 = arith.mulf %77, %82 : vector<4x16x17xf32>
    %84 = vector.extract_strided_slice %66 {offsets = [0, 0, 2], sizes = [4, 16, 17], strides = [1, 1, 1]} : vector<4x16x25xf32> to vector<4x16x17xf32>
    %85 = vector.broadcast %80 : f32 to vector<4x16x17xf32>
    %86 = arith.mulf %84, %85 : vector<4x16x17xf32>
    %87 = arith.addf %83, %86 : vector<4x16x17xf32>
    %c3_i32 = arith.constant 3 : i32
    %88 = arith.cmpi eq, %15, %c3_i32 : i32
    %89 = arith.extui %88 : i1 to i32
    %90 = arith.sitofp %89 : i32 to f32
    %cst_27 = arith.constant 1.000000e+00 : f32
    %91 = arith.subf %cst_27, %90 : f32
    %92 = vector.broadcast %91 : f32 to vector<4x16x17xf32>
    %93 = arith.mulf %87, %92 : vector<4x16x17xf32>
    %94 = vector.extract_strided_slice %66 {offsets = [0, 0, 3], sizes = [4, 16, 17], strides = [1, 1, 1]} : vector<4x16x25xf32> to vector<4x16x17xf32>
    %95 = vector.broadcast %90 : f32 to vector<4x16x17xf32>
    %96 = arith.mulf %94, %95 : vector<4x16x17xf32>
    %97 = arith.addf %93, %96 : vector<4x16x17xf32>
    %c4_i32 = arith.constant 4 : i32
    %98 = arith.cmpi eq, %15, %c4_i32 : i32
    %99 = arith.extui %98 : i1 to i32
    %100 = arith.sitofp %99 : i32 to f32
    %cst_28 = arith.constant 1.000000e+00 : f32
    %101 = arith.subf %cst_28, %100 : f32
    %102 = vector.broadcast %101 : f32 to vector<4x16x17xf32>
    %103 = arith.mulf %97, %102 : vector<4x16x17xf32>
    %104 = vector.extract_strided_slice %66 {offsets = [0, 0, 4], sizes = [4, 16, 17], strides = [1, 1, 1]} : vector<4x16x25xf32> to vector<4x16x17xf32>
    %105 = vector.broadcast %100 : f32 to vector<4x16x17xf32>
    %106 = arith.mulf %104, %105 : vector<4x16x17xf32>
    %107 = arith.addf %103, %106 : vector<4x16x17xf32>
    %c5_i32 = arith.constant 5 : i32
    %108 = arith.cmpi eq, %15, %c5_i32 : i32
    %109 = arith.extui %108 : i1 to i32
    %110 = arith.sitofp %109 : i32 to f32
    %cst_29 = arith.constant 1.000000e+00 : f32
    %111 = arith.subf %cst_29, %110 : f32
    %112 = vector.broadcast %111 : f32 to vector<4x16x17xf32>
    %113 = arith.mulf %107, %112 : vector<4x16x17xf32>
    %114 = vector.extract_strided_slice %66 {offsets = [0, 0, 5], sizes = [4, 16, 17], strides = [1, 1, 1]} : vector<4x16x25xf32> to vector<4x16x17xf32>
    %115 = vector.broadcast %110 : f32 to vector<4x16x17xf32>
    %116 = arith.mulf %114, %115 : vector<4x16x17xf32>
    %117 = arith.addf %113, %116 : vector<4x16x17xf32>
    %c6_i32 = arith.constant 6 : i32
    %118 = arith.cmpi eq, %15, %c6_i32 : i32
    %119 = arith.extui %118 : i1 to i32
    %120 = arith.sitofp %119 : i32 to f32
    %cst_30 = arith.constant 1.000000e+00 : f32
    %121 = arith.subf %cst_30, %120 : f32
    %122 = vector.broadcast %121 : f32 to vector<4x16x17xf32>
    %123 = arith.mulf %117, %122 : vector<4x16x17xf32>
    %124 = vector.extract_strided_slice %66 {offsets = [0, 0, 6], sizes = [4, 16, 17], strides = [1, 1, 1]} : vector<4x16x25xf32> to vector<4x16x17xf32>
    %125 = vector.broadcast %120 : f32 to vector<4x16x17xf32>
    %126 = arith.mulf %124, %125 : vector<4x16x17xf32>
    %127 = arith.addf %123, %126 : vector<4x16x17xf32>
    %c7_i32 = arith.constant 7 : i32
    %128 = arith.cmpi eq, %15, %c7_i32 : i32
    %129 = arith.extui %128 : i1 to i32
    %130 = arith.sitofp %129 : i32 to f32
    %cst_31 = arith.constant 1.000000e+00 : f32
    %131 = arith.subf %cst_31, %130 : f32
    %132 = vector.broadcast %131 : f32 to vector<4x16x17xf32>
    %133 = arith.mulf %127, %132 : vector<4x16x17xf32>
    %134 = vector.extract_strided_slice %66 {offsets = [0, 0, 7], sizes = [4, 16, 17], strides = [1, 1, 1]} : vector<4x16x25xf32> to vector<4x16x17xf32>
    %135 = vector.broadcast %130 : f32 to vector<4x16x17xf32>
    %136 = arith.mulf %134, %135 : vector<4x16x17xf32>
    %137 = arith.addf %133, %136 : vector<4x16x17xf32>
    %c8_i32 = arith.constant 8 : i32
    %138 = arith.cmpi eq, %15, %c8_i32 : i32
    %139 = arith.extui %138 : i1 to i32
    %140 = arith.sitofp %139 : i32 to f32
    %cst_32 = arith.constant 1.000000e+00 : f32
    %141 = arith.subf %cst_32, %140 : f32
    %142 = vector.broadcast %141 : f32 to vector<4x16x17xf32>
    %143 = arith.mulf %137, %142 : vector<4x16x17xf32>
    %144 = vector.extract_strided_slice %66 {offsets = [0, 0, 8], sizes = [4, 16, 17], strides = [1, 1, 1]} : vector<4x16x25xf32> to vector<4x16x17xf32>
    %145 = vector.broadcast %140 : f32 to vector<4x16x17xf32>
    %146 = arith.mulf %144, %145 : vector<4x16x17xf32>
    %147 = arith.addf %143, %146 : vector<4x16x17xf32>
    %148 = vector.extract_strided_slice %147 {offsets = [0, 0, 0], sizes = [4, 16, 16], strides = [1, 1, 1]} : vector<4x16x17xf32> to vector<4x16x16xf32>
    %149 = vector.extract_strided_slice %147 {offsets = [0, 0, 1], sizes = [4, 16, 16], strides = [1, 1, 1]} : vector<4x16x17xf32> to vector<4x16x16xf32>
    %cst_33 = arith.constant 1.000000e+00 : f32
    %150 = vector.broadcast %cst_33 : f32 to vector<1x1x16xf32>
    %151 = arith.subf %150, %48 : vector<1x1x16xf32>
    %152 = vector.broadcast %151 : vector<1x1x16xf32> to vector<4x16x16xf32>
    %153 = arith.mulf %148, %152 : vector<4x16x16xf32>
    %154 = vector.broadcast %48 : vector<1x1x16xf32> to vector<4x16x16xf32>
    %155 = arith.mulf %149, %154 : vector<4x16x16xf32>
    %156 = arith.addf %153, %155 : vector<4x16x16xf32>
    %c0_34 = arith.constant 0 : index
    %c0_35 = arith.constant 0 : index
    %c0_36 = arith.constant 0 : index
    %c0_37 = arith.constant 0 : index
    %157 = vector.load %arg3[%c0_34, %c0_35, %c0_36, %c0_37] : memref<2x4x16x16xf32, #tpu.memory_space<vmem>>, vector<1x4x16x16xf32>
    %158 = vector.shape_cast %157 : vector<1x4x16x16xf32> to vector<4x16x16xf32>
    %159 = vector.shape_cast %156 : vector<4x16x16xf32> to vector<1x4x16x16xf32>
    tpu.vector_store %arg3[%c0_34, %c0_35, %c0_36, %c0_37], %159 {strides = array<i32>} : memref<2x4x16x16xf32, #tpu.memory_space<vmem>>, vector<1x4x16x16xf32>,
    %c1_i32_38 = arith.constant 1 : i32
    %160 = arith.addi %12, %c1_i32_38 : i32
    %161 = arith.index_cast %160 : i32 to index
    %c0_39 = arith.constant 0 : index
    %162 = memref.load %arg1[%161, %c0_39] : memref<2x2xi32, #tpu.memory_space<smem>>
    %c1_i32_40 = arith.constant 1 : i32
    %163 = arith.addi %12, %c1_i32_40 : i32
    %164 = arith.index_cast %163 : i32 to index
    %c1_41 = arith.constant 1 : index
    %165 = memref.load %arg1[%164, %c1_41] : memref<2x2xi32, #tpu.memory_space<smem>>
    %166 = arith.sitofp %162 : i32 to f32
    %167 = arith.sitofp %165 : i32 to f32
    %cst_42 = arith.constant 2.000000e+00 : f32
    %168 = arith.mulf %cst_42, %166 : f32
    %cst_43 = arith.constant 2.400000e+01 : f32
    %169 = arith.divf %168, %cst_43 : f32
    %170 = vector.broadcast %169 : f32 to vector<1x16xf32>
    %171 = arith.addf %7, %170 : vector<1x16xf32>
    %cst_44 = arith.constant 2.000000e+00 : f32
    %172 = arith.mulf %cst_44, %167 : f32
    %cst_45 = arith.constant 2.400000e+01 : f32
    %173 = arith.divf %172, %cst_45 : f32
    %174 = vector.broadcast %173 : f32 to vector<16x1xf32>
    %175 = arith.addf %11, %174 : vector<16x1xf32>
    %cst_46 = arith.constant 1.000000e+00 : f32
    %176 = vector.broadcast %cst_46 : f32 to vector<1x16xf32>
    %177 = arith.addf %171, %176 : vector<1x16xf32>
    %cst_47 = arith.constant 2.400000e+01 : f32
    %178 = vector.broadcast %cst_47 : f32 to vector<1x16xf32>
    %179 = arith.mulf %177, %178 : vector<1x16xf32>
    %cst_48 = arith.constant 1.000000e+00 : f32
    %180 = vector.broadcast %cst_48 : f32 to vector<1x16xf32>
    %181 = arith.subf %179, %180 : vector<1x16xf32>
    %cst_49 = arith.constant 5.000000e-01 : f32
    %182 = vector.broadcast %cst_49 : f32 to vector<1x16xf32>
    %183 = arith.mulf %181, %182 : vector<1x16xf32>
    %cst_50 = arith.constant 1.000000e+00 : f32
    %184 = vector.broadcast %cst_50 : f32 to vector<16x1xf32>
    %185 = arith.addf %175, %184 : vector<16x1xf32>
    %cst_51 = arith.constant 2.400000e+01 : f32
    %186 = vector.broadcast %cst_51 : f32 to vector<16x1xf32>
    %187 = arith.mulf %185, %186 : vector<16x1xf32>
    %cst_52 = arith.constant 1.000000e+00 : f32
    %188 = vector.broadcast %cst_52 : f32 to vector<16x1xf32>
    %189 = arith.subf %187, %188 : vector<16x1xf32>
    %cst_53 = arith.constant 5.000000e-01 : f32
    %190 = vector.broadcast %cst_53 : f32 to vector<16x1xf32>
    %191 = arith.mulf %189, %190 : vector<16x1xf32>
    %192 = vector.broadcast %166 : f32 to vector<1x16xf32>
    %193 = arith.addf %1, %192 : vector<1x16xf32>
    %194 = arith.subf %183, %193 : vector<1x16xf32>
    %195 = vector.shape_cast %194 : vector<1x16xf32> to vector<1x1x16xf32>
    %196 = vector.broadcast %167 : f32 to vector<16x1xf32>
    %197 = arith.addf %3, %196 : vector<16x1xf32>
    %198 = arith.subf %191, %197 : vector<16x1xf32>
    %199 = vector.shape_cast %198 : vector<16x1xf32> to vector<1x16x1xf32>
    %c1_54 = arith.constant 1 : index
    %c0_55 = arith.constant 0 : index
    %200 = arith.index_cast %165 : i32 to index
    %c0_56 = arith.constant 0 : index
    %201 = vector.load %arg2[%c1_54, %c0_55, %200, %c0_56] : memref<2x4x25x25xf32, #tpu.memory_space<vmem>>, vector<1x4x16x25xf32>
    %202 = vector.shape_cast %201 : vector<1x4x16x25xf32> to vector<4x16x25xf32>
    %c1_i32_57 = arith.constant 1 : i32
    %203 = arith.addi %165, %c1_i32_57 : i32
    %c1_58 = arith.constant 1 : index
    %c0_59 = arith.constant 0 : index
    %204 = arith.index_cast %203 : i32 to index
    %c0_60 = arith.constant 0 : index
    %205 = vector.load %arg2[%c1_58, %c0_59, %204, %c0_60] : memref<2x4x25x25xf32, #tpu.memory_space<vmem>>, vector<1x4x16x25xf32>
    %206 = vector.shape_cast %205 : vector<1x4x16x25xf32> to vector<4x16x25xf32>
    %cst_61 = arith.constant 1.000000e+00 : f32
    %207 = vector.broadcast %cst_61 : f32 to vector<1x16x1xf32>
    %208 = arith.subf %207, %199 : vector<1x16x1xf32>
    %209 = vector.broadcast %208 : vector<1x16x1xf32> to vector<4x16x25xf32>
    %210 = arith.mulf %202, %209 : vector<4x16x25xf32>
    %211 = vector.broadcast %199 : vector<1x16x1xf32> to vector<4x16x25xf32>
    %212 = arith.mulf %206, %211 : vector<4x16x25xf32>
    %213 = arith.addf %210, %212 : vector<4x16x25xf32>
    %214 = vector.extract_strided_slice %213 {offsets = [0, 0, 0], sizes = [4, 16, 17], strides = [1, 1, 1]} : vector<4x16x25xf32> to vector<4x16x17xf32>
    %c1_i32_62 = arith.constant 1 : i32
    %215 = arith.cmpi eq, %162, %c1_i32_62 : i32
    %216 = arith.extui %215 : i1 to i32
    %217 = arith.sitofp %216 : i32 to f32
    %cst_63 = arith.constant 1.000000e+00 : f32
    %218 = arith.subf %cst_63, %217 : f32
    %219 = vector.broadcast %218 : f32 to vector<4x16x17xf32>
    %220 = arith.mulf %214, %219 : vector<4x16x17xf32>
    %221 = vector.extract_strided_slice %213 {offsets = [0, 0, 1], sizes = [4, 16, 17], strides = [1, 1, 1]} : vector<4x16x25xf32> to vector<4x16x17xf32>
    %222 = vector.broadcast %217 : f32 to vector<4x16x17xf32>
    %223 = arith.mulf %221, %222 : vector<4x16x17xf32>
    %224 = arith.addf %220, %223 : vector<4x16x17xf32>
    %c2_i32_64 = arith.constant 2 : i32
    %225 = arith.cmpi eq, %162, %c2_i32_64 : i32
    %226 = arith.extui %225 : i1 to i32
    %227 = arith.sitofp %226 : i32 to f32
    %cst_65 = arith.constant 1.000000e+00 : f32
    %228 = arith.subf %cst_65, %227 : f32
    %229 = vector.broadcast %228 : f32 to vector<4x16x17xf32>
    %230 = arith.mulf %224, %229 : vector<4x16x17xf32>
    %231 = vector.extract_strided_slice %213 {offsets = [0, 0, 2], sizes = [4, 16, 17], strides = [1, 1, 1]} : vector<4x16x25xf32> to vector<4x16x17xf32>
    %232 = vector.broadcast %227 : f32 to vector<4x16x17xf32>
    %233 = arith.mulf %231, %232 : vector<4x16x17xf32>
    %234 = arith.addf %230, %233 : vector<4x16x17xf32>
    %c3_i32_66 = arith.constant 3 : i32
    %235 = arith.cmpi eq, %162, %c3_i32_66 : i32
    %236 = arith.extui %235 : i1 to i32
    %237 = arith.sitofp %236 : i32 to f32
    %cst_67 = arith.constant 1.000000e+00 : f32
    %238 = arith.subf %cst_67, %237 : f32
    %239 = vector.broadcast %238 : f32 to vector<4x16x17xf32>
    %240 = arith.mulf %234, %239 : vector<4x16x17xf32>
    %241 = vector.extract_strided_slice %213 {offsets = [0, 0, 3], sizes = [4, 16, 17], strides = [1, 1, 1]} : vector<4x16x25xf32> to vector<4x16x17xf32>
    %242 = vector.broadcast %237 : f32 to vector<4x16x17xf32>
    %243 = arith.mulf %241, %242 : vector<4x16x17xf32>
    %244 = arith.addf %240, %243 : vector<4x16x17xf32>
    %c4_i32_68 = arith.constant 4 : i32
    %245 = arith.cmpi eq, %162, %c4_i32_68 : i32
    %246 = arith.extui %245 : i1 to i32
    %247 = arith.sitofp %246 : i32 to f32
    %cst_69 = arith.constant 1.000000e+00 : f32
    %248 = arith.subf %cst_69, %247 : f32
    %249 = vector.broadcast %248 : f32 to vector<4x16x17xf32>
    %250 = arith.mulf %244, %249 : vector<4x16x17xf32>
    %251 = vector.extract_strided_slice %213 {offsets = [0, 0, 4], sizes = [4, 16, 17], strides = [1, 1, 1]} : vector<4x16x25xf32> to vector<4x16x17xf32>
    %252 = vector.broadcast %247 : f32 to vector<4x16x17xf32>
    %253 = arith.mulf %251, %252 : vector<4x16x17xf32>
    %254 = arith.addf %250, %253 : vector<4x16x17xf32>
    %c5_i32_70 = arith.constant 5 : i32
    %255 = arith.cmpi eq, %162, %c5_i32_70 : i32
    %256 = arith.extui %255 : i1 to i32
    %257 = arith.sitofp %256 : i32 to f32
    %cst_71 = arith.constant 1.000000e+00 : f32
    %258 = arith.subf %cst_71, %257 : f32
    %259 = vector.broadcast %258 : f32 to vector<4x16x17xf32>
    %260 = arith.mulf %254, %259 : vector<4x16x17xf32>
    %261 = vector.extract_strided_slice %213 {offsets = [0, 0, 5], sizes = [4, 16, 17], strides = [1, 1, 1]} : vector<4x16x25xf32> to vector<4x16x17xf32>
    %262 = vector.broadcast %257 : f32 to vector<4x16x17xf32>
    %263 = arith.mulf %261, %262 : vector<4x16x17xf32>
    %264 = arith.addf %260, %263 : vector<4x16x17xf32>
    %c6_i32_72 = arith.constant 6 : i32
    %265 = arith.cmpi eq, %162, %c6_i32_72 : i32
    %266 = arith.extui %265 : i1 to i32
    %267 = arith.sitofp %266 : i32 to f32
    %cst_73 = arith.constant 1.000000e+00 : f32
    %268 = arith.subf %cst_73, %267 : f32
    %269 = vector.broadcast %268 : f32 to vector<4x16x17xf32>
    %270 = arith.mulf %264, %269 : vector<4x16x17xf32>
    %271 = vector.extract_strided_slice %213 {offsets = [0, 0, 6], sizes = [4, 16, 17], strides = [1, 1, 1]} : vector<4x16x25xf32> to vector<4x16x17xf32>
    %272 = vector.broadcast %267 : f32 to vector<4x16x17xf32>
    %273 = arith.mulf %271, %272 : vector<4x16x17xf32>
    %274 = arith.addf %270, %273 : vector<4x16x17xf32>
    %c7_i32_74 = arith.constant 7 : i32
    %275 = arith.cmpi eq, %162, %c7_i32_74 : i32
    %276 = arith.extui %275 : i1 to i32
    %277 = arith.sitofp %276 : i32 to f32
    %cst_75 = arith.constant 1.000000e+00 : f32
    %278 = arith.subf %cst_75, %277 : f32
    %279 = vector.broadcast %278 : f32 to vector<4x16x17xf32>
    %280 = arith.mulf %274, %279 : vector<4x16x17xf32>
    %281 = vector.extract_strided_slice %213 {offsets = [0, 0, 7], sizes = [4, 16, 17], strides = [1, 1, 1]} : vector<4x16x25xf32> to vector<4x16x17xf32>
    %282 = vector.broadcast %277 : f32 to vector<4x16x17xf32>
    %283 = arith.mulf %281, %282 : vector<4x16x17xf32>
    %284 = arith.addf %280, %283 : vector<4x16x17xf32>
    %c8_i32_76 = arith.constant 8 : i32
    %285 = arith.cmpi eq, %162, %c8_i32_76 : i32
    %286 = arith.extui %285 : i1 to i32
    %287 = arith.sitofp %286 : i32 to f32
    %cst_77 = arith.constant 1.000000e+00 : f32
    %288 = arith.subf %cst_77, %287 : f32
    %289 = vector.broadcast %288 : f32 to vector<4x16x17xf32>
    %290 = arith.mulf %284, %289 : vector<4x16x17xf32>
    %291 = vector.extract_strided_slice %213 {offsets = [0, 0, 8], sizes = [4, 16, 17], strides = [1, 1, 1]} : vector<4x16x25xf32> to vector<4x16x17xf32>
    %292 = vector.broadcast %287 : f32 to vector<4x16x17xf32>
    %293 = arith.mulf %291, %292 : vector<4x16x17xf32>
    %294 = arith.addf %290, %293 : vector<4x16x17xf32>
    %295 = vector.extract_strided_slice %294 {offsets = [0, 0, 0], sizes = [4, 16, 16], strides = [1, 1, 1]} : vector<4x16x17xf32> to vector<4x16x16xf32>
    %296 = vector.extract_strided_slice %294 {offsets = [0, 0, 1], sizes = [4, 16, 16], strides = [1, 1, 1]} : vector<4x16x17xf32> to vector<4x16x16xf32>
    %cst_78 = arith.constant 1.000000e+00 : f32
    %297 = vector.broadcast %cst_78 : f32 to vector<1x1x16xf32>
    %298 = arith.subf %297, %195 : vector<1x1x16xf32>
    %299 = vector.broadcast %298 : vector<1x1x16xf32> to vector<4x16x16xf32>
    %300 = arith.mulf %295, %299 : vector<4x16x16xf32>
    %301 = vector.broadcast %195 : vector<1x1x16xf32> to vector<4x16x16xf32>
    %302 = arith.mulf %296, %301 : vector<4x16x16xf32>
    %303 = arith.addf %300, %302 : vector<4x16x16xf32>
    %c1_79 = arith.constant 1 : index
    %c0_80 = arith.constant 0 : index
    %c0_81 = arith.constant 0 : index
    %c0_82 = arith.constant 0 : index
    %304 = vector.load %arg3[%c1_79, %c0_80, %c0_81, %c0_82] : memref<2x4x16x16xf32, #tpu.memory_space<vmem>>, vector<1x4x16x16xf32>
    %305 = vector.shape_cast %304 : vector<1x4x16x16xf32> to vector<4x16x16xf32>
    %306 = vector.shape_cast %303 : vector<4x16x16xf32> to vector<1x4x16x16xf32>
    tpu.vector_store %arg3[%c1_79, %c0_80, %c0_81, %c0_82], %306 {strides = array<i32>} : memref<2x4x16x16xf32, #tpu.memory_space<vmem>>, vector<1x4x16x16xf32>,
    return
  }
  func.func @transform_0(%arg0: i32, %arg1: memref<2x2xi32, #tpu.memory_space<smem>>) -> (i32, i32, i32, i32) {
    %c0_i32 = arith.constant 0 : i32
    %c0_i32_0 = arith.constant 0 : i32
    %c0_i32_1 = arith.constant 0 : i32
    %c0_i32_2 = arith.constant 0 : i32
    return %arg0, %c0_i32, %c0_i32_0, %c0_i32_1 : i32, i32, i32, i32
  }
  func.func @transform_1(%arg0: i32, %arg1: memref<2x2xi32, #tpu.memory_space<smem>>) -> (i32, i32, i32, i32) {
    %c0_i32 = arith.constant 0 : i32
    %c0_i32_0 = arith.constant 0 : i32
    %c0_i32_1 = arith.constant 0 : i32
    %c0_i32_2 = arith.constant 0 : i32
    return %arg0, %c0_i32, %c0_i32_0, %c0_i32_1 : i32, i32, i32, i32
  }
}

</mosaic_0001>

<llo_original>
// kernel: tpu_custom_call.1
$region0: #{tpu_custom_call.1}
  #allocation0 [shape = 'u32[]', space=smem, size = 0x4, offset = 0x4, fixed_abs, tag = 'smem constant byte address 0x4 - core index']
  #allocation1 [shape = 'u32[72,128]{1,0:T(1,128)}', space=vmem, size = 0x9000, scoped, tag = 'internal scratch']
  #allocation2 [shape = 's32[1]{0}', space=sflag, size = 0x4, scoped, tag = 'scoped memory for tpu_custom_call.1']
  #allocation3 [shape = 'u8[1024]{0}', space=smem, size = 0x400, scoped, tag = 'prefetched SMEM operand 0']
  %s0 = inlined_call_operand.vmem [shape: s32[2,2], index: 0, kind: input, shape index: {}]
  %s1 = inlined_call_operand.vmem [shape: f32[2,4,25,25], index: 1, kind: input, shape index: {}]
  %s2 = inlined_call_operand.hbm [shape: f32[2,4,16,16], index: 2, kind: output, shape index: {}]
  %s3 = sld [smem:[#allocation0]]
  $region14: #{tpu_custom_call.1} parent=0
    _
  %s5 = ssub.s32 1, %s3
  %s6 = scalar_select 0, %s5, %s3
  %s8 = sshll.u32 %s0, 4
  %s9 = int_to_ptr.vmem [resolvable:$true] %s8
  %11 = dma.vmem_to_smem %s9, 32, [#allocation3], [#allocation2]
  %13 = dma.done [#allocation2], 32
  %14 = sfence
  $region1: #{tpu_custom_call.1} parent=0
    #allocation4 [shape = 'u8[65536]{0}', space=vmem, size = 0x10000, scoped, tag = 'output window, operand 0, single buffered']
    #allocation5 [shape = 's32[1]{0}', space=sflag, size = 0x4, scoped, tag = 'scoped memory for tpu_custom_call.1']
    %15 = vsyncpa [#allocation5], 0
    // Predicated region
    $region2: #{tpu_custom_call.1} parent=1 // pred_check
      _
    $region3: #{tpu_custom_call.1} parent=1 // pred_check_branch
      %17 = sbr.rel (0) target = $region5
    $region4: #{tpu_custom_call.1} parent=1 // pred_region
      _
    $region5: #{tpu_custom_call.1} parent=1 // pred_fallthru
      _
    %v18 = vlaneseq
    %v19 = vand.u32 %v18, 127
    %v20 = vcvt.s32.f32 %v19
    %v21 = vlaneseq
    %v22 = vshrl.u32 %v21, 7
    %v23 = vadd.s32 %v22, 8
    %v24 = vcvt.s32.f32 %v22
    %v25 = vcvt.s32.f32 %v23
    %v26 = vmul.f32 %v20, 0.083333336
    %v27 = vadd.f32 %v26, -0.9583333
    %v28 = vmul.f32 %v24, 0.083333336
    %v29 = vmul.f32 %v25, 0.083333336
    %v30 = vadd.f32 %v28, -0.9583333
    %v31 = vadd.f32 %v29, -0.9583333
    %s32 = smul.u32 0, 2
    %s33 = smul.u32 %s32, 128
    %s34 = sld [smem:[#allocation3 + %s33]]
    %s35 = sadd.s32 %s33, 1
    %s36 = sld [smem:[#allocation3 + %s35]]
    %s37 = scvt.s32.f32 %s34
    %s38 = scvt.s32.f32 %s36
    %s39 = smul.f32 %s37, 2.0
    %v40 = vrcp.pop 24.0
    %v41 = vmul.f32 24.0, %v40
    %v42 = vsub.f32 1.0, %v41
    %v43 = vmul.f32 %v40, %v42
    %v44 = vadd.f32 %v40, %v43
    %vm45 = vweird.f32 %v40
    %v46 = vsel %vm45, %v40, %v44
    %s47 = vtos %v46
    %s48 = smul.f32 %s39, %s47
    %v49 = vstv %s48
    %v50 = vadd.f32 %v27, %v49
    %s51 = smul.f32 %s38, 2.0
    %v52 = vrcp.pop 24.0
    %v53 = vmul.f32 24.0, %v52
    %v54 = vsub.f32 1.0, %v53
    %v55 = vmul.f32 %v52, %v54
    %v56 = vadd.f32 %v52, %v55
    %vm57 = vweird.f32 %v52
    %v58 = vsel %vm57, %v52, %v56
    %s59 = vtos %v58
    %s60 = smul.f32 %s51, %s59
    %v61 = vstv %s60
    %v62 = vadd.f32 %v30, %v61
    %v63 = vadd.f32 %v31, %v61
    %v64 = vadd.f32 %v50, 1.0
    %v65 = vmul.f32 %v64, 24.0
    %v66 = vsub.f32 %v65, 1.0
    %v67 = vmul.f32 %v66, 0.5
    %v68 = vadd.f32 %v62, 1.0
    %v69 = vadd.f32 %v63, 1.0
    %v70 = vmul.f32 %v68, 24.0
    %v71 = vmul.f32 %v69, 24.0
    %v72 = vsub.f32 %v70, 1.0
    %v73 = vsub.f32 %v71, 1.0
    %v74 = vmul.f32 %v72, 0.5
    %v75 = vmul.f32 %v73, 0.5
    %v76 = vstv %s37
    %v77 = vadd.f32 %v20, %v76
    %v78 = vsub.f32 %v67, %v77
    %v79 = vstv %s38
    %v80 = vadd.f32 %v24, %v79
    %v81 = vadd.f32 %v25, %v79
    %v82 = vsub.f32 %v74, %v80
    %v83 = vsub.f32 %v75, %v81
    %s84 = scalar_lea.vmem %s1, %s36
    %v85 = vld [vmem:[%s84] sm:$0xff]
    %v86 = vld [vmem:[%s84 + $0x8] sm:$0xff]
    %v87 = vld [vmem:[%s84 + $0x20] sm:$0xff]
    %v88 = vld [vmem:[%s84 + $0x28] sm:$0xff]
    %v89 = vld [vmem:[%s84 + $0x40] sm:$0xff]
    %v90 = vld [vmem:[%s84 + $0x48] sm:$0xff]
    %v91 = vld [vmem:[%s84 + $0x60] sm:$0xff]
    %v92 = vld [vmem:[%s84 + $0x68] sm:$0xff]
    %s93 = sadd.s32 %s36, 1
    %s94 = scalar_lea.vmem %s1, %s93
    %v95 = vld [vmem:[%s94] sm:$0xff]
    %v96 = vld [vmem:[%s94 + $0x8] sm:$0xff]
    %v97 = vld [vmem:[%s94 + $0x20] sm:$0xff]
    %v98 = vld [vmem:[%s94 + $0x28] sm:$0xff]
    %v99 = vld [vmem:[%s94 + $0x40] sm:$0xff]
    %v100 = vld [vmem:[%s94 + $0x48] sm:$0xff]
    %v101 = vld [vmem:[%s94 + $0x60] sm:$0xff]
    %v102 = vld [vmem:[%s94 + $0x68] sm:$0xff]
    %v103 = vsub.f32 1.0, %v82
    %v104 = vsub.f32 1.0, %v83
    %v105 = vmul.f32 %v85, %v103
    %v106 = vmul.f32 %v86, %v104
    %v107 = vmul.f32 %v87, %v103
    %v108 = vmul.f32 %v88, %v104
    %v109 = vmul.f32 %v89, %v103
    %v110 = vmul.f32 %v90, %v104
    %v111 = vmul.f32 %v91, %v103
    %v112 = vmul.f32 %v92, %v104
    %v113 = vmul.f32 %v95, %v82
    %v114 = vmul.f32 %v96, %v83
    %v115 = vmul.f32 %v97, %v82
    %v116 = vmul.f32 %v98, %v83
    %v117 = vmul.f32 %v99, %v82
    %v118 = vmul.f32 %v100, %v83
    %v119 = vmul.f32 %v101, %v82
    %v120 = vmul.f32 %v102, %v83
    %v121 = vadd.f32 %v105, %v113
    %v122 = vadd.f32 %v106, %v114
    %v123 = vadd.f32 %v107, %v115
    %v124 = vadd.f32 %v108, %v116
    %v125 = vadd.f32 %v109, %v117
    %v126 = vadd.f32 %v110, %v118
    %v127 = vadd.f32 %v111, %v119
    %v128 = vadd.f32 %v112, %v120
    %p129 = scmp.eq.s32.totalorder %s34, 1
    %s130 = scalar_select %p129, 1, 0
    %s131 = scvt.s32.f32 %s130
    %s132 = ssub.f32 1.0, %s131
    %v133 = vstv %s132
    %v134 = vmul.f32 %v121, %v133
    %v135 = vmul.f32 %v122, %v133
    %v136 = vmul.f32 %v123, %v133
    %v137 = vmul.f32 %v124, %v133
    %v138 = vmul.f32 %v125, %v133
    %v139 = vmul.f32 %v126, %v133
    %v140 = vmul.f32 %v127, %v133
    %v141 = vmul.f32 %v128, %v133
    %v142 = vstv %s131
    %v143 = vmul.f32 %v121, %v142
    %v144 = vmul.f32 %v122, %v142
    %v145 = vmul.f32 %v123, %v142
    %v146 = vmul.f32 %v124, %v142
    %v147 = vmul.f32 %v125, %v142
    %v148 = vmul.f32 %v126, %v142
    %v149 = vmul.f32 %v127, %v142
    %v150 = vmul.f32 %v128, %v142
    %159 = vrot.lane.b32.xlu0 %v143, 127
    %v160 = vpop.permute.xlu0 %159
    %161 = vrot.lane.b32.xlu0 %v144, 127
    %v162 = vpop.permute.xlu0 %161
    %163 = vrot.lane.b32.xlu0 %v145, 127
    %v164 = vpop.permute.xlu0 %163
    %165 = vrot.lane.b32.xlu0 %v146, 127
    %v166 = vpop.permute.xlu0 %165
    %167 = vrot.lane.b32.xlu0 %v147, 127
    %v168 = vpop.permute.xlu0 %167
    %169 = vrot.lane.b32.xlu0 %v148, 127
    %v170 = vpop.permute.xlu0 %169
    %171 = vrot.lane.b32.xlu0 %v149, 127
    %v172 = vpop.permute.xlu0 %171
    %173 = vrot.lane.b32.xlu0 %v150, 127
    %v174 = vpop.permute.xlu0 %173
    %v183 = vadd.f32 %v134, %v160
    %v184 = vadd.f32 %v135, %v162
    %v185 = vadd.f32 %v136, %v164
    %v186 = vadd.f32 %v137, %v166
    %v187 = vadd.f32 %v138, %v168
    %v188 = vadd.f32 %v139, %v170
    %v189 = vadd.f32 %v140, %v172
    %v190 = vadd.f32 %v141, %v174
    %p191 = scmp.eq.s32.totalorder %s34, 2
    %s192 = scalar_select %p191, 1, 0
    %s193 = scvt.s32.f32 %s192
    %s194 = ssub.f32 1.0, %s193
    %v195 = vstv %s194
    %v196 = vmul.f32 %v183, %v195
    %v197 = vmul.f32 %v184, %v195
    %v198 = vmul.f32 %v185, %v195
    %v199 = vmul.f32 %v186, %v195
    %v200 = vmul.f32 %v187, %v195
    %v201 = vmul.f32 %v188, %v195
    %v202 = vmul.f32 %v189, %v195
    %v203 = vmul.f32 %v190, %v195
    %v204 = vstv %s193
    %v205 = vmul.f32 %v121, %v204
    %v206 = vmul.f32 %v122, %v204
    %v207 = vmul.f32 %v123, %v204
    %v208 = vmul.f32 %v124, %v204
    %v209 = vmul.f32 %v125, %v204
    %v210 = vmul.f32 %v126, %v204
    %v211 = vmul.f32 %v127, %v204
    %v212 = vmul.f32 %v128, %v204
    %221 = vrot.lane.b32.xlu0 %v205, 126
    %v222 = vpop.permute.xlu0 %221
    %223 = vrot.lane.b32.xlu0 %v206, 126
    %v224 = vpop.permute.xlu0 %223
    %225 = vrot.lane.b32.xlu0 %v207, 126
    %v226 = vpop.permute.xlu0 %225
    %227 = vrot.lane.b32.xlu0 %v208, 126
    %v228 = vpop.permute.xlu0 %227
    %229 = vrot.lane.b32.xlu0 %v209, 126
    %v230 = vpop.permute.xlu0 %229
    %231 = vrot.lane.b32.xlu0 %v210, 126
    %v232 = vpop.permute.xlu0 %231
    %233 = vrot.lane.b32.xlu0 %v211, 126
    %v234 = vpop.permute.xlu0 %233
    %235 = vrot.lane.b32.xlu0 %v212, 126
    %v236 = vpop.permute.xlu0 %235
    %v245 = vadd.f32 %v196, %v222
    %v246 = vadd.f32 %v197, %v224
    %v247 = vadd.f32 %v198, %v226
    %v248 = vadd.f32 %v199, %v228
    %v249 = vadd.f32 %v200, %v230
    %v250 = vadd.f32 %v201, %v232
    %v251 = vadd.f32 %v202, %v234
    %v252 = vadd.f32 %v203, %v236
    %p253 = scmp.eq.s32.totalorder %s34, 3
    %s254 = scalar_select %p253, 1, 0
    %s255 = scvt.s32.f32 %s254
    %s256 = ssub.f32 1.0, %s255
    %v257 = vstv %s256
    %v258 = vmul.f32 %v245, %v257
    %v259 = vmul.f32 %v246, %v257
    %v260 = vmul.f32 %v247, %v257
    %v261 = vmul.f32 %v248, %v257
    %v262 = vmul.f32 %v249, %v257
    %v263 = vmul.f32 %v250, %v257
    %v264 = vmul.f32 %v251, %v257
    %v265 = vmul.f32 %v252, %v257
    %v266 = vstv %s255
    %v267 = vmul.f32 %v121, %v266
    %v268 = vmul.f32 %v122, %v266
    %v269 = vmul.f32 %v123, %v266
    %v270 = vmul.f32 %v124, %v266
    %v271 = vmul.f32 %v125, %v266
    %v272 = vmul.f32 %v126, %v266
    %v273 = vmul.f32 %v127, %v266
    %v274 = vmul.f32 %v128, %v266
    %283 = vrot.lane.b32.xlu0 %v267, 125
    %v284 = vpop.permute.xlu0 %283
    %285 = vrot.lane.b32.xlu0 %v268, 125
    %v286 = vpop.permute.xlu0 %285
    %287 = vrot.lane.b32.xlu0 %v269, 125
    %v288 = vpop.permute.xlu0 %287
    %289 = vrot.lane.b32.xlu0 %v270, 125
    %v290 = vpop.permute.xlu0 %289
    %291 = vrot.lane.b32.xlu0 %v271, 125
    %v292 = vpop.permute.xlu0 %291
    %293 = vrot.lane.b32.xlu0 %v272, 125
    %v294 = vpop.permute.xlu0 %293
    %295 = vrot.lane.b32.xlu0 %v273, 125
    %v296 = vpop.permute.xlu0 %295
    %297 = vrot.lane.b32.xlu0 %v274, 125
    %v298 = vpop.permute.xlu0 %297
    %v307 = vadd.f32 %v258, %v284
    %v308 = vadd.f32 %v259, %v286
    %v309 = vadd.f32 %v260, %v288
    %v310 = vadd.f32 %v261, %v290
    %v311 = vadd.f32 %v262, %v292
    %v312 = vadd.f32 %v263, %v294
    %v313 = vadd.f32 %v264, %v296
    %v314 = vadd.f32 %v265, %v298
    %p315 = scmp.eq.s32.totalorder %s34, 4
    %s316 = scalar_select %p315, 1, 0
    %s317 = scvt.s32.f32 %s316
    %s318 = ssub.f32 1.0, %s317
    %v319 = vstv %s318
    %v320 = vmul.f32 %v307, %v319
    %v321 = vmul.f32 %v308, %v319
    %v322 = vmul.f32 %v309, %v319
    %v323 = vmul.f32 %v310, %v319
    %v324 = vmul.f32 %v311, %v319
    %v325 = vmul.f32 %v312, %v319
    %v326 = vmul.f32 %v313, %v319
    %v327 = vmul.f32 %v314, %v319
    %v328 = vstv %s317
    %v329 = vmul.f32 %v121, %v328
    %v330 = vmul.f32 %v122, %v328
    %v331 = vmul.f32 %v123, %v328
    %v332 = vmul.f32 %v124, %v328
    %v333 = vmul.f32 %v125, %v328
    %v334 = vmul.f32 %v126, %v328
    %v335 = vmul.f32 %v127, %v328
    %v336 = vmul.f32 %v128, %v328
    %345 = vrot.lane.b32.xlu0 %v329, 124
    %v346 = vpop.permute.xlu0 %345
    %347 = vrot.lane.b32.xlu0 %v330, 124
    %v348 = vpop.permute.xlu0 %347
    %349 = vrot.lane.b32.xlu0 %v331, 124
    %v350 = vpop.permute.xlu0 %349
    %351 = vrot.lane.b32.xlu0 %v332, 124
    %v352 = vpop.permute.xlu0 %351
    %353 = vrot.lane.b32.xlu0 %v333, 124
    %v354 = vpop.permute.xlu0 %353
    %355 = vrot.lane.b32.xlu0 %v334, 124
    %v356 = vpop.permute.xlu0 %355
    %357 = vrot.lane.b32.xlu0 %v335, 124
    %v358 = vpop.permute.xlu0 %357
    %359 = vrot.lane.b32.xlu0 %v336, 124
    %v360 = vpop.permute.xlu0 %359
    %v369 = vadd.f32 %v320, %v346
    %v370 = vadd.f32 %v321, %v348
    %v371 = vadd.f32 %v322, %v350
    %v372 = vadd.f32 %v323, %v352
    %v373 = vadd.f32 %v324, %v354
    %v374 = vadd.f32 %v325, %v356
    %v375 = vadd.f32 %v326, %v358
    %v376 = vadd.f32 %v327, %v360
    %p377 = scmp.eq.s32.totalorder %s34, 5
    %s378 = scalar_select %p377, 1, 0
    %s379 = scvt.s32.f32 %s378
    %s380 = ssub.f32 1.0, %s379
    %v381 = vstv %s380
    %v382 = vmul.f32 %v369, %v381
    %v383 = vmul.f32 %v370, %v381
    %v384 = vmul.f32 %v371, %v381
    %v385 = vmul.f32 %v372, %v381
    %v386 = vmul.f32 %v373, %v381
    %v387 = vmul.f32 %v374, %v381
    %v388 = vmul.f32 %v375, %v381
    %v389 = vmul.f32 %v376, %v381
    %v390 = vstv %s379
    %v391 = vmul.f32 %v121, %v390
    %v392 = vmul.f32 %v122, %v390
    %v393 = vmul.f32 %v123, %v390
    %v394 = vmul.f32 %v124, %v390
    %v395 = vmul.f32 %v125, %v390
    %v396 = vmul.f32 %v126, %v390
    %v397 = vmul.f32 %v127, %v390
    %v398 = vmul.f32 %v128, %v390
    %407 = vrot.lane.b32.xlu0 %v391, 123
    %v408 = vpop.permute.xlu0 %407
    %409 = vrot.lane.b32.xlu0 %v392, 123
    %v410 = vpop.permute.xlu0 %409
    %411 = vrot.lane.b32.xlu0 %v393, 123
    %v412 = vpop.permute.xlu0 %411
    %413 = vrot.lane.b32.xlu0 %v394, 123
    %v414 = vpop.permute.xlu0 %413
    %415 = vrot.lane.b32.xlu0 %v395, 123
    %v416 = vpop.permute.xlu0 %415
    %417 = vrot.lane.b32.xlu0 %v396, 123
    %v418 = vpop.permute.xlu0 %417
    %419 = vrot.lane.b32.xlu0 %v397, 123
    %v420 = vpop.permute.xlu0 %419
    %421 = vrot.lane.b32.xlu0 %v398, 123
    %v422 = vpop.permute.xlu0 %421
    %v431 = vadd.f32 %v382, %v408
    %v432 = vadd.f32 %v383, %v410
    %v433 = vadd.f32 %v384, %v412
    %v434 = vadd.f32 %v385, %v414
    %v435 = vadd.f32 %v386, %v416
    %v436 = vadd.f32 %v387, %v418
    %v437 = vadd.f32 %v388, %v420
    %v438 = vadd.f32 %v389, %v422
    %p439 = scmp.eq.s32.totalorder %s34, 6
    %s440 = scalar_select %p439, 1, 0
    %s441 = scvt.s32.f32 %s440
    %s442 = ssub.f32 1.0, %s441
    %v443 = vstv %s442
    %v444 = vmul.f32 %v431, %v443
    %v445 = vmul.f32 %v432, %v443
    %v446 = vmul.f32 %v433, %v443
    %v447 = vmul.f32 %v434, %v443
    %v448 = vmul.f32 %v435, %v443
    %v449 = vmul.f32 %v436, %v443
    %v450 = vmul.f32 %v437, %v443
    %v451 = vmul.f32 %v438, %v443
    %v452 = vstv %s441
    %v453 = vmul.f32 %v121, %v452
    %v454 = vmul.f32 %v122, %v452
    %v455 = vmul.f32 %v123, %v452
    %v456 = vmul.f32 %v124, %v452
    %v457 = vmul.f32 %v125, %v452
    %v458 = vmul.f32 %v126, %v452
    %v459 = vmul.f32 %v127, %v452
    %v460 = vmul.f32 %v128, %v452
    %469 = vrot.lane.b32.xlu0 %v453, 122
    %v470 = vpop.permute.xlu0 %469
    %471 = vrot.lane.b32.xlu0 %v454, 122
    %v472 = vpop.permute.xlu0 %471
    %473 = vrot.lane.b32.xlu0 %v455, 122
    %v474 = vpop.permute.xlu0 %473
    %475 = vrot.lane.b32.xlu0 %v456, 122
    %v476 = vpop.permute.xlu0 %475
    %477 = vrot.lane.b32.xlu0 %v457, 122
    %v478 = vpop.permute.xlu0 %477
    %479 = vrot.lane.b32.xlu0 %v458, 122
    %v480 = vpop.permute.xlu0 %479
    %481 = vrot.lane.b32.xlu0 %v459, 122
    %v482 = vpop.permute.xlu0 %481
    %483 = vrot.lane.b32.xlu0 %v460, 122
    %v484 = vpop.permute.xlu0 %483
    %v493 = vadd.f32 %v444, %v470
    %v494 = vadd.f32 %v445, %v472
    %v495 = vadd.f32 %v446, %v474
    %v496 = vadd.f32 %v447, %v476
    %v497 = vadd.f32 %v448, %v478
    %v498 = vadd.f32 %v449, %v480
    %v499 = vadd.f32 %v450, %v482
    %v500 = vadd.f32 %v451, %v484
    %p501 = scmp.eq.s32.totalorder %s34, 7
    %s502 = scalar_select %p501, 1, 0
    %s503 = scvt.s32.f32 %s502
    %s504 = ssub.f32 1.0, %s503
    %v505 = vstv %s504
    %v506 = vmul.f32 %v493, %v505
    %v507 = vmul.f32 %v494, %v505
    %v508 = vmul.f32 %v495, %v505
    %v509 = vmul.f32 %v496, %v505
    %v510 = vmul.f32 %v497, %v505
    %v511 = vmul.f32 %v498, %v505
    %v512 = vmul.f32 %v499, %v505
    %v513 = vmul.f32 %v500, %v505
    %v514 = vstv %s503
    %v515 = vmul.f32 %v121, %v514
    %v516 = vmul.f32 %v122, %v514
    %v517 = vmul.f32 %v123, %v514
    %v518 = vmul.f32 %v124, %v514
    %v519 = vmul.f32 %v125, %v514
    %v520 = vmul.f32 %v126, %v514
    %v521 = vmul.f32 %v127, %v514
    %v522 = vmul.f32 %v128, %v514
    %531 = vrot.lane.b32.xlu0 %v515, 121
    %v532 = vpop.permute.xlu0 %531
    %533 = vrot.lane.b32.xlu0 %v516, 121
    %v534 = vpop.permute.xlu0 %533
    %535 = vrot.lane.b32.xlu0 %v517, 121
    %v536 = vpop.permute.xlu0 %535
    %537 = vrot.lane.b32.xlu0 %v518, 121
    %v538 = vpop.permute.xlu0 %537
    %539 = vrot.lane.b32.xlu0 %v519, 121
    %v540 = vpop.permute.xlu0 %539
    %541 = vrot.lane.b32.xlu0 %v520, 121
    %v542 = vpop.permute.xlu0 %541
    %543 = vrot.lane.b32.xlu0 %v521, 121
    %v544 = vpop.permute.xlu0 %543
    %545 = vrot.lane.b32.xlu0 %v522, 121
    %v546 = vpop.permute.xlu0 %545
    %v555 = vadd.f32 %v506, %v532
    %v556 = vadd.f32 %v507, %v534
    %v557 = vadd.f32 %v508, %v536
    %v558 = vadd.f32 %v509, %v538
    %v559 = vadd.f32 %v510, %v540
    %v560 = vadd.f32 %v511, %v542
    %v561 = vadd.f32 %v512, %v544
    %v562 = vadd.f32 %v513, %v546
    %p563 = scmp.eq.s32.totalorder %s34, 8
    %s564 = scalar_select %p563, 1, 0
    %s565 = scvt.s32.f32 %s564
    %s566 = ssub.f32 1.0, %s565
    %v567 = vstv %s566
    %v568 = vmul.f32 %v555, %v567
    %v569 = vmul.f32 %v556, %v567
    %v570 = vmul.f32 %v557, %v567
    %v571 = vmul.f32 %v558, %v567
    %v572 = vmul.f32 %v559, %v567
    %v573 = vmul.f32 %v560, %v567
    %v574 = vmul.f32 %v561, %v567
    %v575 = vmul.f32 %v562, %v567
    %v576 = vstv %s565
    %v577 = vmul.f32 %v121, %v576
    %v578 = vmul.f32 %v122, %v576
    %v579 = vmul.f32 %v123, %v576
    %v580 = vmul.f32 %v124, %v576
    %v581 = vmul.f32 %v125, %v576
    %v582 = vmul.f32 %v126, %v576
    %v583 = vmul.f32 %v127, %v576
    %v584 = vmul.f32 %v128, %v576
    %593 = vrot.lane.b32.xlu0 %v577, 120
    %v594 = vpop.permute.xlu0 %593
    %595 = vrot.lane.b32.xlu0 %v578, 120
    %v596 = vpop.permute.xlu0 %595
    %597 = vrot.lane.b32.xlu0 %v579, 120
    %v598 = vpop.permute.xlu0 %597
    %599 = vrot.lane.b32.xlu0 %v580, 120
    %v600 = vpop.permute.xlu0 %599
    %601 = vrot.lane.b32.xlu0 %v581, 120
    %v602 = vpop.permute.xlu0 %601
    %603 = vrot.lane.b32.xlu0 %v582, 120
    %v604 = vpop.permute.xlu0 %603
    %605 = vrot.lane.b32.xlu0 %v583, 120
    %v606 = vpop.permute.xlu0 %605
    %607 = vrot.lane.b32.xlu0 %v584, 120
    %v608 = vpop.permute.xlu0 %607
    %v617 = vadd.f32 %v568, %v594
    %v618 = vadd.f32 %v569, %v596
    %v619 = vadd.f32 %v570, %v598
    %v620 = vadd.f32 %v571, %v600
    %v621 = vadd.f32 %v572, %v602
    %v622 = vadd.f32 %v573, %v604
    %v623 = vadd.f32 %v574, %v606
    %v624 = vadd.f32 %v575, %v608
    %v625 = vsub.f32 1.0, %v78
    %v626 = vmul.f32 %v617, %v625
    %v627 = vmul.f32 %v618, %v625
    %v628 = vmul.f32 %v619, %v625
    %v629 = vmul.f32 %v620, %v625
    %v630 = vmul.f32 %v621, %v625
    %v631 = vmul.f32 %v622, %v625
    %v632 = vmul.f32 %v623, %v625
    %v633 = vmul.f32 %v624, %v625
    %635 = vrot.lane.b32.xlu0 %v78, 1
    %v636 = vpop.permute.xlu0 %635
    %v638 = vmul.f32 %v617, %v636
    %v639 = vmul.f32 %v618, %v636
    %v640 = vmul.f32 %v619, %v636
    %v641 = vmul.f32 %v620, %v636
    %v642 = vmul.f32 %v621, %v636
    %v643 = vmul.f32 %v622, %v636
    %v644 = vmul.f32 %v623, %v636
    %v645 = vmul.f32 %v624, %v636
    %654 = vrot.lane.b32.xlu0 %v638, 127
    %v655 = vpop.permute.xlu0 %654
    %656 = vrot.lane.b32.xlu0 %v639, 127
    %v657 = vpop.permute.xlu0 %656
    %658 = vrot.lane.b32.xlu0 %v640, 127
    %v659 = vpop.permute.xlu0 %658
    %660 = vrot.lane.b32.xlu0 %v641, 127
    %v661 = vpop.permute.xlu0 %660
    %662 = vrot.lane.b32.xlu0 %v642, 127
    %v663 = vpop.permute.xlu0 %662
    %664 = vrot.lane.b32.xlu0 %v643, 127
    %v665 = vpop.permute.xlu0 %664
    %666 = vrot.lane.b32.xlu0 %v644, 127
    %v667 = vpop.permute.xlu0 %666
    %668 = vrot.lane.b32.xlu0 %v645, 127
    %v669 = vpop.permute.xlu0 %668
    %v678 = vadd.f32 %v626, %v655
    %v679 = vadd.f32 %v627, %v657
    %v680 = vadd.f32 %v628, %v659
    %v681 = vadd.f32 %v629, %v661
    %v682 = vadd.f32 %v630, %v663
    %v683 = vadd.f32 %v631, %v665
    %v684 = vadd.f32 %v632, %v667
    %v685 = vadd.f32 %v633, %v669
    %vm686 = vcmask 130048
    %687 = vst.msk [vmem:[#allocation4] sm:$0xff] %vm686, %v678
    %688 = vst.msk [vmem:[#allocation4 + $0x8] sm:$0xff] %vm686, %v679
    %689 = vst.msk [vmem:[#allocation4 + $0x10] sm:$0xff] %vm686, %v680
    %690 = vst.msk [vmem:[#allocation4 + $0x18] sm:$0xff] %vm686, %v681
    %691 = vst.msk [vmem:[#allocation4 + $0x20] sm:$0xff] %vm686, %v682
    %692 = vst.msk [vmem:[#allocation4 + $0x28] sm:$0xff] %vm686, %v683
    %693 = vst.msk [vmem:[#allocation4 + $0x30] sm:$0xff] %vm686, %v684
    %694 = vst.msk [vmem:[#allocation4 + $0x38] sm:$0xff] %vm686, %v685
    %s695 = sadd.s32 %s32, 1
    %s696 = smul.u32 %s695, 128
    %s697 = sld [smem:[#allocation3 + %s696]]
    %s698 = sadd.s32 %s696, 1
    %s699 = sld [smem:[#allocation3 + %s698]]
    %s700 = scvt.s32.f32 %s697
    %s701 = scvt.s32.f32 %s699
    %s702 = smul.f32 %s700, 2.0
    %v703 = vrcp.pop 24.0
    %v704 = vmul.f32 24.0, %v703
    %v705 = vsub.f32 1.0, %v704
    %v706 = vmul.f32 %v703, %v705
    %v707 = vadd.f32 %v703, %v706
    %vm708 = vweird.f32 %v703
    %v709 = vsel %vm708, %v703, %v707
    %s710 = vtos %v709
    %s711 = smul.f32 %s702, %s710
    %v712 = vstv %s711
    %v713 = vadd.f32 %v27, %v712
    %s714 = smul.f32 %s701, 2.0
    %v715 = vrcp.pop 24.0
    %v716 = vmul.f32 24.0, %v715
    %v717 = vsub.f32 1.0, %v716
    %v718 = vmul.f32 %v715, %v717
    %v719 = vadd.f32 %v715, %v718
    %vm720 = vweird.f32 %v715
    %v721 = vsel %vm720, %v715, %v719
    %s722 = vtos %v721
    %s723 = smul.f32 %s714, %s722
    %v724 = vstv %s723
    %v725 = vadd.f32 %v30, %v724
    %v726 = vadd.f32 %v31, %v724
    %v727 = vadd.f32 %v713, 1.0
    %v728 = vmul.f32 %v727, 24.0
    %v729 = vsub.f32 %v728, 1.0
    %v730 = vmul.f32 %v729, 0.5
    %v731 = vadd.f32 %v725, 1.0
    %v732 = vadd.f32 %v726, 1.0
    %v733 = vmul.f32 %v731, 24.0
    %v734 = vmul.f32 %v732, 24.0
    %v735 = vsub.f32 %v733, 1.0
    %v736 = vsub.f32 %v734, 1.0
    %v737 = vmul.f32 %v735, 0.5
    %v738 = vmul.f32 %v736, 0.5
    %v739 = vstv %s700
    %v740 = vadd.f32 %v20, %v739
    %v741 = vsub.f32 %v730, %v740
    %v742 = vstv %s701
    %v743 = vadd.f32 %v24, %v742
    %v744 = vadd.f32 %v25, %v742
    %v745 = vsub.f32 %v737, %v743
    %v746 = vsub.f32 %v738, %v744
    %s747 = sadd.s32 %s699, 128
    %s748 = scalar_lea.vmem %s1, %s747
    %v749 = vld [vmem:[%s748] sm:$0xff]
    %v750 = vld [vmem:[%s748 + $0x8] sm:$0xff]
    %v751 = vld [vmem:[%s748 + $0x20] sm:$0xff]
    %v752 = vld [vmem:[%s748 + $0x28] sm:$0xff]
    %v753 = vld [vmem:[%s748 + $0x40] sm:$0xff]
    %v754 = vld [vmem:[%s748 + $0x48] sm:$0xff]
    %v755 = vld [vmem:[%s748 + $0x60] sm:$0xff]
    %v756 = vld [vmem:[%s748 + $0x68] sm:$0xff]
    %s757 = sadd.s32 %s699, 1
    %s758 = sadd.s32 %s757, 128
    %s759 = scalar_lea.vmem %s1, %s758
    %v760 = vld [vmem:[%s759] sm:$0xff]
    %v761 = vld [vmem:[%s759 + $0x8] sm:$0xff]
    %v762 = vld [vmem:[%s759 + $0x20] sm:$0xff]
    %v763 = vld [vmem:[%s759 + $0x28] sm:$0xff]
    %v764 = vld [vmem:[%s759 + $0x40] sm:$0xff]
    %v765 = vld [vmem:[%s759 + $0x48] sm:$0xff]
    %v766 = vld [vmem:[%s759 + $0x60] sm:$0xff]
    %v767 = vld [vmem:[%s759 + $0x68] sm:$0xff]
    %v768 = vsub.f32 1.0, %v745
    %v769 = vsub.f32 1.0, %v746
    %v770 = vmul.f32 %v749, %v768
    %v771 = vmul.f32 %v750, %v769
    %v772 = vmul.f32 %v751, %v768
    %v773 = vmul.f32 %v752, %v769
    %v774 = vmul.f32 %v753, %v768
    %v775 = vmul.f32 %v754, %v769
    %v776 = vmul.f32 %v755, %v768
    %v777 = vmul.f32 %v756, %v769
    %v778 = vmul.f32 %v760, %v745
    %v779 = vmul.f32 %v761, %v746
    %v780 = vmul.f32 %v762, %v745
    %v781 = vmul.f32 %v763, %v746
    %v782 = vmul.f32 %v764, %v745
    %v783 = vmul.f32 %v765, %v746
    %v784 = vmul.f32 %v766, %v745
    %v785 = vmul.f32 %v767, %v746
    %v786 = vadd.f32 %v770, %v778
    %v787 = vadd.f32 %v771, %v779
    %v788 = vadd.f32 %v772, %v780
    %v789 = vadd.f32 %v773, %v781
    %v790 = vadd.f32 %v774, %v782
    %v791 = vadd.f32 %v775, %v783
    %v792 = vadd.f32 %v776, %v784
    %v793 = vadd.f32 %v777, %v785
    %p794 = scmp.eq.s32.totalorder %s697, 1
    %s795 = scalar_select %p794, 1, 0
    %s796 = scvt.s32.f32 %s795
    %s797 = ssub.f32 1.0, %s796
    %v798 = vstv %s797
    %v799 = vmul.f32 %v786, %v798
    %v800 = vmul.f32 %v787, %v798
    %v801 = vmul.f32 %v788, %v798
    %v802 = vmul.f32 %v789, %v798
    %v803 = vmul.f32 %v790, %v798
    %v804 = vmul.f32 %v791, %v798
    %v805 = vmul.f32 %v792, %v798
    %v806 = vmul.f32 %v793, %v798
    %v807 = vstv %s796
    %v808 = vmul.f32 %v786, %v807
    %v809 = vmul.f32 %v787, %v807
    %v810 = vmul.f32 %v788, %v807
    %v811 = vmul.f32 %v789, %v807
    %v812 = vmul.f32 %v790, %v807
    %v813 = vmul.f32 %v791, %v807
    %v814 = vmul.f32 %v792, %v807
    %v815 = vmul.f32 %v793, %v807
    %824 = vrot.lane.b32.xlu0 %v808, 127
    %v825 = vpop.permute.xlu0 %824
    %826 = vrot.lane.b32.xlu0 %v809, 127
    %v827 = vpop.permute.xlu0 %826
    %828 = vrot.lane.b32.xlu0 %v810, 127
    %v829 = vpop.permute.xlu0 %828
    %830 = vrot.lane.b32.xlu0 %v811, 127
    %v831 = vpop.permute.xlu0 %830
    %832 = vrot.lane.b32.xlu0 %v812, 127
    %v833 = vpop.permute.xlu0 %832
    %834 = vrot.lane.b32.xlu0 %v813, 127
    %v835 = vpop.permute.xlu0 %834
    %836 = vrot.lane.b32.xlu0 %v814, 127
    %v837 = vpop.permute.xlu0 %836
    %838 = vrot.lane.b32.xlu0 %v815, 127
    %v839 = vpop.permute.xlu0 %838
    %v848 = vadd.f32 %v799, %v825
    %v849 = vadd.f32 %v800, %v827
    %v850 = vadd.f32 %v801, %v829
    %v851 = vadd.f32 %v802, %v831
    %v852 = vadd.f32 %v803, %v833
    %v853 = vadd.f32 %v804, %v835
    %v854 = vadd.f32 %v805, %v837
    %v855 = vadd.f32 %v806, %v839
    %p856 = scmp.eq.s32.totalorder %s697, 2
    %s857 = scalar_select %p856, 1, 0
    %s858 = scvt.s32.f32 %s857
    %s859 = ssub.f32 1.0, %s858
    %v860 = vstv %s859
    %v861 = vmul.f32 %v848, %v860
    %v862 = vmul.f32 %v849, %v860
    %v863 = vmul.f32 %v850, %v860
    %v864 = vmul.f32 %v851, %v860
    %v865 = vmul.f32 %v852, %v860
    %v866 = vmul.f32 %v853, %v860
    %v867 = vmul.f32 %v854, %v860
    %v868 = vmul.f32 %v855, %v860
    %v869 = vstv %s858
    %v870 = vmul.f32 %v786, %v869
    %v871 = vmul.f32 %v787, %v869
    %v872 = vmul.f32 %v788, %v869
    %v873 = vmul.f32 %v789, %v869
    %v874 = vmul.f32 %v790, %v869
    %v875 = vmul.f32 %v791, %v869
    %v876 = vmul.f32 %v792, %v869
    %v877 = vmul.f32 %v793, %v869
    %886 = vrot.lane.b32.xlu0 %v870, 126
    %v887 = vpop.permute.xlu0 %886
    %888 = vrot.lane.b32.xlu0 %v871, 126
    %v889 = vpop.permute.xlu0 %888
    %890 = vrot.lane.b32.xlu0 %v872, 126
    %v891 = vpop.permute.xlu0 %890
    %892 = vrot.lane.b32.xlu0 %v873, 126
    %v893 = vpop.permute.xlu0 %892
    %894 = vrot.lane.b32.xlu0 %v874, 126
    %v895 = vpop.permute.xlu0 %894
    %896 = vrot.lane.b32.xlu0 %v875, 126
    %v897 = vpop.permute.xlu0 %896
    %898 = vrot.lane.b32.xlu0 %v876, 126
    %v899 = vpop.permute.xlu0 %898
    %900 = vrot.lane.b32.xlu0 %v877, 126
    %v901 = vpop.permute.xlu0 %900
    %v910 = vadd.f32 %v861, %v887
    %v911 = vadd.f32 %v862, %v889
    %v912 = vadd.f32 %v863, %v891
    %v913 = vadd.f32 %v864, %v893
    %v914 = vadd.f32 %v865, %v895
    %v915 = vadd.f32 %v866, %v897
    %v916 = vadd.f32 %v867, %v899
    %v917 = vadd.f32 %v868, %v901
    %p918 = scmp.eq.s32.totalorder %s697, 3
    %s919 = scalar_select %p918, 1, 0
    %s920 = scvt.s32.f32 %s919
    %s921 = ssub.f32 1.0, %s920
    %v922 = vstv %s921
    %v923 = vmul.f32 %v910, %v922
    %v924 = vmul.f32 %v911, %v922
    %v925 = vmul.f32 %v912, %v922
    %v926 = vmul.f32 %v913, %v922
    %v927 = vmul.f32 %v914, %v922
    %v928 = vmul.f32 %v915, %v922
    %v929 = vmul.f32 %v916, %v922
    %v930 = vmul.f32 %v917, %v922
    %v931 = vstv %s920
    %v932 = vmul.f32 %v786, %v931
    %v933 = vmul.f32 %v787, %v931
    %v934 = vmul.f32 %v788, %v931
    %v935 = vmul.f32 %v789, %v931
    %v936 = vmul.f32 %v790, %v931
    %v937 = vmul.f32 %v791, %v931
    %v938 = vmul.f32 %v792, %v931
    %v939 = vmul.f32 %v793, %v931
    %948 = vrot.lane.b32.xlu0 %v932, 125
    %v949 = vpop.permute.xlu0 %948
    %950 = vrot.lane.b32.xlu0 %v933, 125
    %v951 = vpop.permute.xlu0 %950
    %952 = vrot.lane.b32.xlu0 %v934, 125
    %v953 = vpop.permute.xlu0 %952
    %954 = vrot.lane.b32.xlu0 %v935, 125
    %v955 = vpop.permute.xlu0 %954
    %956 = vrot.lane.b32.xlu0 %v936, 125
    %v957 = vpop.permute.xlu0 %956
    %958 = vrot.lane.b32.xlu0 %v937, 125
    %v959 = vpop.permute.xlu0 %958
    %960 = vrot.lane.b32.xlu0 %v938, 125
    %v961 = vpop.permute.xlu0 %960
    %962 = vrot.lane.b32.xlu0 %v939, 125
    %v963 = vpop.permute.xlu0 %962
    %v972 = vadd.f32 %v923, %v949
    %v973 = vadd.f32 %v924, %v951
    %v974 = vadd.f32 %v925, %v953
    %v975 = vadd.f32 %v926, %v955
    %v976 = vadd.f32 %v927, %v957
    %v977 = vadd.f32 %v928, %v959
    %v978 = vadd.f32 %v929, %v961
    %v979 = vadd.f32 %v930, %v963
    %p980 = scmp.eq.s32.totalorder %s697, 4
    %s981 = scalar_select %p980, 1, 0
    %s982 = scvt.s32.f32 %s981
    %s983 = ssub.f32 1.0, %s982
    %v984 = vstv %s983
    %v985 = vmul.f32 %v972, %v984
    %v986 = vmul.f32 %v973, %v984
    %v987 = vmul.f32 %v974, %v984
    %v988 = vmul.f32 %v975, %v984
    %v989 = vmul.f32 %v976, %v984
    %v990 = vmul.f32 %v977, %v984
    %v991 = vmul.f32 %v978, %v984
    %v992 = vmul.f32 %v979, %v984
    %v993 = vstv %s982
    %v994 = vmul.f32 %v786, %v993
    %v995 = vmul.f32 %v787, %v993
    %v996 = vmul.f32 %v788, %v993
    %v997 = vmul.f32 %v789, %v993
    %v998 = vmul.f32 %v790, %v993
    %v999 = vmul.f32 %v791, %v993
    %v1000 = vmul.f32 %v792, %v993
    %v1001 = vmul.f32 %v793, %v993
    %1010 = vrot.lane.b32.xlu0 %v994, 124
    %v1011 = vpop.permute.xlu0 %1010
    %1012 = vrot.lane.b32.xlu0 %v995, 124
    %v1013 = vpop.permute.xlu0 %1012
    %1014 = vrot.lane.b32.xlu0 %v996, 124
    %v1015 = vpop.permute.xlu0 %1014
    %1016 = vrot.lane.b32.xlu0 %v997, 124
    %v1017 = vpop.permute.xlu0 %1016
    %1018 = vrot.lane.b32.xlu0 %v998, 124
    %v1019 = vpop.permute.xlu0 %1018
    %1020 = vrot.lane.b32.xlu0 %v999, 124
    %v1021 = vpop.permute.xlu0 %1020
    %1022 = vrot.lane.b32.xlu0 %v1000, 124
    %v1023 = vpop.permute.xlu0 %1022
    %1024 = vrot.lane.b32.xlu0 %v1001, 124
    %v1025 = vpop.permute.xlu0 %1024
    %v1034 = vadd.f32 %v985, %v1011
    %v1035 = vadd.f32 %v986, %v1013
    %v1036 = vadd.f32 %v987, %v1015
    %v1037 = vadd.f32 %v988, %v1017
    %v1038 = vadd.f32 %v989, %v1019
    %v1039 = vadd.f32 %v990, %v1021
    %v1040 = vadd.f32 %v991, %v1023
    %v1041 = vadd.f32 %v992, %v1025
    %p1042 = scmp.eq.s32.totalorder %s697, 5
    %s1043 = scalar_select %p1042, 1, 0
    %s1044 = scvt.s32.f32 %s1043
    %s1045 = ssub.f32 1.0, %s1044
    %v1046 = vstv %s1045
    %v1047 = vmul.f32 %v1034, %v1046
    %v1048 = vmul.f32 %v1035, %v1046
    %v1049 = vmul.f32 %v1036, %v1046
    %v1050 = vmul.f32 %v1037, %v1046
    %v1051 = vmul.f32 %v1038, %v1046
    %v1052 = vmul.f32 %v1039, %v1046
    %v1053 = vmul.f32 %v1040, %v1046
    %v1054 = vmul.f32 %v1041, %v1046
    %v1055 = vstv %s1044
    %v1056 = vmul.f32 %v786, %v1055
    %v1057 = vmul.f32 %v787, %v1055
    %v1058 = vmul.f32 %v788, %v1055
    %v1059 = vmul.f32 %v789, %v1055
    %v1060 = vmul.f32 %v790, %v1055
    %v1061 = vmul.f32 %v791, %v1055
    %v1062 = vmul.f32 %v792, %v1055
    %v1063 = vmul.f32 %v793, %v1055
    %1072 = vrot.lane.b32.xlu0 %v1056, 123
    %v1073 = vpop.permute.xlu0 %1072
    %1074 = vrot.lane.b32.xlu0 %v1057, 123
    %v1075 = vpop.permute.xlu0 %1074
    %1076 = vrot.lane.b32.xlu0 %v1058, 123
    %v1077 = vpop.permute.xlu0 %1076
    %1078 = vrot.lane.b32.xlu0 %v1059, 123
    %v1079 = vpop.permute.xlu0 %1078
    %1080 = vrot.lane.b32.xlu0 %v1060, 123
    %v1081 = vpop.permute.xlu0 %1080
    %1082 = vrot.lane.b32.xlu0 %v1061, 123
    %v1083 = vpop.permute.xlu0 %1082
    %1084 = vrot.lane.b32.xlu0 %v1062, 123
    %v1085 = vpop.permute.xlu0 %1084
    %1086 = vrot.lane.b32.xlu0 %v1063, 123
    %v1087 = vpop.permute.xlu0 %1086
    %v1096 = vadd.f32 %v1047, %v1073
    %v1097 = vadd.f32 %v1048, %v1075
    %v1098 = vadd.f32 %v1049, %v1077
    %v1099 = vadd.f32 %v1050, %v1079
    %v1100 = vadd.f32 %v1051, %v1081
    %v1101 = vadd.f32 %v1052, %v1083
    %v1102 = vadd.f32 %v1053, %v1085
    %v1103 = vadd.f32 %v1054, %v1087
    %p1104 = scmp.eq.s32.totalorder %s697, 6
    %s1105 = scalar_select %p1104, 1, 0
    %s1106 = scvt.s32.f32 %s1105
    %s1107 = ssub.f32 1.0, %s1106
    %v1108 = vstv %s1107
    %v1109 = vmul.f32 %v1096, %v1108
    %v1110 = vmul.f32 %v1097, %v1108
    %v1111 = vmul.f32 %v1098, %v1108
    %v1112 = vmul.f32 %v1099, %v1108
    %v1113 = vmul.f32 %v1100, %v1108
    %v1114 = vmul.f32 %v1101, %v1108
    %v1115 = vmul.f32 %v1102, %v1108
    %v1116 = vmul.f32 %v1103, %v1108
    %v1117 = vstv %s1106
    %v1118 = vmul.f32 %v786, %v1117
    %v1119 = vmul.f32 %v787, %v1117
    %v1120 = vmul.f32 %v788, %v1117
    %v1121 = vmul.f32 %v789, %v1117
    %v1122 = vmul.f32 %v790, %v1117
    %v1123 = vmul.f32 %v791, %v1117
    %v1124 = vmul.f32 %v792, %v1117
    %v1125 = vmul.f32 %v793, %v1117
    %1134 = vrot.lane.b32.xlu0 %v1118, 122
    %v1135 = vpop.permute.xlu0 %1134
    %1136 = vrot.lane.b32.xlu0 %v1119, 122
    %v1137 = vpop.permute.xlu0 %1136
    %1138 = vrot.lane.b32.xlu0 %v1120, 122
    %v1139 = vpop.permute.xlu0 %1138
    %1140 = vrot.lane.b32.xlu0 %v1121, 122
    %v1141 = vpop.permute.xlu0 %1140
    %1142 = vrot.lane.b32.xlu0 %v1122, 122
    %v1143 = vpop.permute.xlu0 %1142
    %1144 = vrot.lane.b32.xlu0 %v1123, 122
    %v1145 = vpop.permute.xlu0 %1144
    %1146 = vrot.lane.b32.xlu0 %v1124, 122
    %v1147 = vpop.permute.xlu0 %1146
    %1148 = vrot.lane.b32.xlu0 %v1125, 122
    %v1149 = vpop.permute.xlu0 %1148
    %v1158 = vadd.f32 %v1109, %v1135
    %v1159 = vadd.f32 %v1110, %v1137
    %v1160 = vadd.f32 %v1111, %v1139
    %v1161 = vadd.f32 %v1112, %v1141
    %v1162 = vadd.f32 %v1113, %v1143
    %v1163 = vadd.f32 %v1114, %v1145
    %v1164 = vadd.f32 %v1115, %v1147
    %v1165 = vadd.f32 %v1116, %v1149
    %p1166 = scmp.eq.s32.totalorder %s697, 7
    %s1167 = scalar_select %p1166, 1, 0
    %s1168 = scvt.s32.f32 %s1167
    %s1169 = ssub.f32 1.0, %s1168
    %v1170 = vstv %s1169
    %v1171 = vmul.f32 %v1158, %v1170
    %v1172 = vmul.f32 %v1159, %v1170
    %v1173 = vmul.f32 %v1160, %v1170
    %v1174 = vmul.f32 %v1161, %v1170
    %v1175 = vmul.f32 %v1162, %v1170
    %v1176 = vmul.f32 %v1163, %v1170
    %v1177 = vmul.f32 %v1164, %v1170
    %v1178 = vmul.f32 %v1165, %v1170
    %v1179 = vstv %s1168
    %v1180 = vmul.f32 %v786, %v1179
    %v1181 = vmul.f32 %v787, %v1179
    %v1182 = vmul.f32 %v788, %v1179
    %v1183 = vmul.f32 %v789, %v1179
    %v1184 = vmul.f32 %v790, %v1179
    %v1185 = vmul.f32 %v791, %v1179
    %v1186 = vmul.f32 %v792, %v1179
    %v1187 = vmul.f32 %v793, %v1179
    %1196 = vrot.lane.b32.xlu0 %v1180, 121
    %v1197 = vpop.permute.xlu0 %1196
    %1198 = vrot.lane.b32.xlu0 %v1181, 121
    %v1199 = vpop.permute.xlu0 %1198
    %1200 = vrot.lane.b32.xlu0 %v1182, 121
    %v1201 = vpop.permute.xlu0 %1200
    %1202 = vrot.lane.b32.xlu0 %v1183, 121
    %v1203 = vpop.permute.xlu0 %1202
    %1204 = vrot.lane.b32.xlu0 %v1184, 121
    %v1205 = vpop.permute.xlu0 %1204
    %1206 = vrot.lane.b32.xlu0 %v1185, 121
    %v1207 = vpop.permute.xlu0 %1206
    %1208 = vrot.lane.b32.xlu0 %v1186, 121
    %v1209 = vpop.permute.xlu0 %1208
    %1210 = vrot.lane.b32.xlu0 %v1187, 121
    %v1211 = vpop.permute.xlu0 %1210
    %v1220 = vadd.f32 %v1171, %v1197
    %v1221 = vadd.f32 %v1172, %v1199
    %v1222 = vadd.f32 %v1173, %v1201
    %v1223 = vadd.f32 %v1174, %v1203
    %v1224 = vadd.f32 %v1175, %v1205
    %v1225 = vadd.f32 %v1176, %v1207
    %v1226 = vadd.f32 %v1177, %v1209
    %v1227 = vadd.f32 %v1178, %v1211
    %p1228 = scmp.eq.s32.totalorder %s697, 8
    %s1229 = scalar_select %p1228, 1, 0
    %s1230 = scvt.s32.f32 %s1229
    %s1231 = ssub.f32 1.0, %s1230
    %v1232 = vstv %s1231
    %v1233 = vmul.f32 %v1220, %v1232
    %v1234 = vmul.f32 %v1221, %v1232
    %v1235 = vmul.f32 %v1222, %v1232
    %v1236 = vmul.f32 %v1223, %v1232
    %v1237 = vmul.f32 %v1224, %v1232
    %v1238 = vmul.f32 %v1225, %v1232
    %v1239 = vmul.f32 %v1226, %v1232
    %v1240 = vmul.f32 %v1227, %v1232
    %v1241 = vstv %s1230
    %v1242 = vmul.f32 %v786, %v1241
    %v1243 = vmul.f32 %v787, %v1241
    %v1244 = vmul.f32 %v788, %v1241
    %v1245 = vmul.f32 %v789, %v1241
    %v1246 = vmul.f32 %v790, %v1241
    %v1247 = vmul.f32 %v791, %v1241
    %v1248 = vmul.f32 %v792, %v1241
    %v1249 = vmul.f32 %v793, %v1241
    %1258 = vrot.lane.b32.xlu0 %v1242, 120
    %v1259 = vpop.permute.xlu0 %1258
    %1260 = vrot.lane.b32.xlu0 %v1243, 120
    %v1261 = vpop.permute.xlu0 %1260
    %1262 = vrot.lane.b32.xlu0 %v1244, 120
    %v1263 = vpop.permute.xlu0 %1262
    %1264 = vrot.lane.b32.xlu0 %v1245, 120
    %v1265 = vpop.permute.xlu0 %1264
    %1266 = vrot.lane.b32.xlu0 %v1246, 120
    %v1267 = vpop.permute.xlu0 %1266
    %1268 = vrot.lane.b32.xlu0 %v1247, 120
    %v1269 = vpop.permute.xlu0 %1268
    %1270 = vrot.lane.b32.xlu0 %v1248, 120
    %v1271 = vpop.permute.xlu0 %1270
    %1272 = vrot.lane.b32.xlu0 %v1249, 120
    %v1273 = vpop.permute.xlu0 %1272
    %v1282 = vadd.f32 %v1233, %v1259
    %v1283 = vadd.f32 %v1234, %v1261
    %v1284 = vadd.f32 %v1235, %v1263
    %v1285 = vadd.f32 %v1236, %v1265
    %v1286 = vadd.f32 %v1237, %v1267
    %v1287 = vadd.f32 %v1238, %v1269
    %v1288 = vadd.f32 %v1239, %v1271
    %v1289 = vadd.f32 %v1240, %v1273
    %v1290 = vsub.f32 1.0, %v741
    %v1291 = vmul.f32 %v1282, %v1290
    %v1292 = vmul.f32 %v1283, %v1290
    %v1293 = vmul.f32 %v1284, %v1290
    %v1294 = vmul.f32 %v1285, %v1290
    %v1295 = vmul.f32 %v1286, %v1290
    %v1296 = vmul.f32 %v1287, %v1290
    %v1297 = vmul.f32 %v1288, %v1290
    %v1298 = vmul.f32 %v1289, %v1290
    %1300 = vrot.lane.b32.xlu0 %v741, 1
    %v1301 = vpop.permute.xlu0 %1300
    %v1303 = vmul.f32 %v1282, %v1301
    %v1304 = vmul.f32 %v1283, %v1301
    %v1305 = vmul.f32 %v1284, %v1301
    %v1306 = vmul.f32 %v1285, %v1301
    %v1307 = vmul.f32 %v1286, %v1301
    %v1308 = vmul.f32 %v1287, %v1301
    %v1309 = vmul.f32 %v1288, %v1301
    %v1310 = vmul.f32 %v1289, %v1301
    %1319 = vrot.lane.b32.xlu0 %v1303, 127
    %v1320 = vpop.permute.xlu0 %1319
    %1321 = vrot.lane.b32.xlu0 %v1304, 127
    %v1322 = vpop.permute.xlu0 %1321
    %1323 = vrot.lane.b32.xlu0 %v1305, 127
    %v1324 = vpop.permute.xlu0 %1323
    %1325 = vrot.lane.b32.xlu0 %v1306, 127
    %v1326 = vpop.permute.xlu0 %1325
    %1327 = vrot.lane.b32.xlu0 %v1307, 127
    %v1328 = vpop.permute.xlu0 %1327
    %1329 = vrot.lane.b32.xlu0 %v1308, 127
    %v1330 = vpop.permute.xlu0 %1329
    %1331 = vrot.lane.b32.xlu0 %v1309, 127
    %v1332 = vpop.permute.xlu0 %1331
    %1333 = vrot.lane.b32.xlu0 %v1310, 127
    %v1334 = vpop.permute.xlu0 %1333
    %v1343 = vadd.f32 %v1291, %v1320
    %v1344 = vadd.f32 %v1292, %v1322
    %v1345 = vadd.f32 %v1293, %v1324
    %v1346 = vadd.f32 %v1294, %v1326
    %v1347 = vadd.f32 %v1295, %v1328
    %v1348 = vadd.f32 %v1296, %v1330
    %v1349 = vadd.f32 %v1297, %v1332
    %v1350 = vadd.f32 %v1298, %v1334
    %s1351 = scalar_lea.vmem [#allocation4], 64
    %1352 = vst.msk [vmem:[%s1351] sm:$0xff] %vm686, %v1343
    %1353 = vst.msk [vmem:[%s1351 + $0x8] sm:$0xff] %vm686, %v1344
    %1354 = vst.msk [vmem:[%s1351 + $0x10] sm:$0xff] %vm686, %v1345
    %1355 = vst.msk [vmem:[%s1351 + $0x18] sm:$0xff] %vm686, %v1346
    %1356 = vst.msk [vmem:[%s1351 + $0x20] sm:$0xff] %vm686, %v1347
    %1357 = vst.msk [vmem:[%s1351 + $0x28] sm:$0xff] %vm686, %v1348
    %1358 = vst.msk [vmem:[%s1351 + $0x30] sm:$0xff] %vm686, %v1349
    %1359 = vst.msk [vmem:[%s1351 + $0x38] sm:$0xff] %vm686, %v1350
    // Predicated region
    $region6: #{tpu_custom_call.1} parent=1 // pred_check
      _
    $region7: #{tpu_custom_call.1} parent=1 // pred_check_branch
      %1361 = sbr.rel (0) target = $region9
    $region8: #{tpu_custom_call.1} parent=1 // pred_region
      %1363 = vsyncadd [#allocation5], 0
      %s1364 = sshll.u32 [#allocation4], 4
      %s1365 = int_to_ptr.vmem [resolvable:$true] %s1364
      %s1366 = sshll.u32 %s2, 4
      %s1367 = int_to_ptr.hbm [resolvable:$true] %s1366
      %1372 = dma.vmem_to_hbm [thread:$0]  %s1365, 2048, %s1367, [#allocation5], 128, 128, 8
    $region9: #{tpu_custom_call.1} parent=1 // pred_fallthru
      _
    // Predicated region
    $region10: #{tpu_custom_call.1} parent=1 // pred_check
      _
    $region11: #{tpu_custom_call.1} parent=1 // pred_check_branch
      %1374 = sbr.rel (0) target = $region13
    $region12: #{tpu_custom_call.1} parent=1 // pred_region
      %1376 = dma.done [#allocation5], 2048
    $region13: #{tpu_custom_call.1} parent=1 // pred_fallthru
      _
    %1377 = vsyncpa [#allocation5], 1

</llo_original>
